<compile_context>
chip_gen: v7x
topology: tpu7x:2x2x1
jax: 0.10.0
libtpu: 0.0.40
codegen_flags: <defaults>
</compile_context>

<pallas_src>
import math
from functools import partial

import jax
import jax.numpy as jnp
from jax.experimental import pallas as pl
from jax.experimental.pallas import tpu as pltpu


# ----------------------- buffer construction (init-time) ---------------------
def sinusoidal_table(max_seq_len, embed_dim, dtype=jnp.float32):
    """Exact equivalent of the PyTorch module's registered `pe` buffer
    (without the leading batch dim)."""
    position = jnp.arange(max_seq_len, dtype=jnp.float32)[:, None]        # [L, 1]
    div_term = jnp.exp(
        jnp.arange(0, embed_dim, 2, dtype=jnp.float32)
        * (-math.log(10000.0) / embed_dim)
    )                                                                     # [D/2]
    angles = position * div_term                                          # [L, D/2]
    pe = jnp.zeros((max_seq_len, embed_dim), jnp.float32)
    pe = pe.at[:, 0::2].set(jnp.sin(angles))
    pe = pe.at[:, 1::2].set(jnp.cos(angles))
    return pe.astype(dtype)


# --------------------------------- kernel ------------------------------------
def _add_pe_kernel(x_ref, pe_ref, o_ref):
    # x_ref / o_ref: [tile_s, D] tile for (current batch element, current S
    # tile) -- batch dim squeezed by BlockSpec.  pe_ref: matching [tile_s, D]
    # slice of the positional table (shared across the batch axis).
    x = x_ref[...]
    o_ref[...] = (x + pe_ref[...].astype(x.dtype)).astype(o_ref.dtype)


# -------------------------------- wrapper ------------------------------------
@partial(jax.jit, static_argnames=("seq_tile",))
def positional_encoding_forward(x, pe, *, seq_tile=512):
    """x: [B, S, D], pe: [max_seq_len, D] -> [B, S, D] (x.dtype)."""
    B, S, D = x.shape
    if S > pe.shape[0]:
        raise ValueError(
            f"sequence length {S} exceeds positional table length {pe.shape[0]}"
        )
    if pe.shape[1] != D:
        raise ValueError(f"embed_dim mismatch: x has {D}, pe has {pe.shape[1]}")

    pe_s = pe[:S]  # static slice == self.pe[:, :x.size(1)]

    # S-tile: full S when short (block == full dim is always legal), otherwise
    # a multiple-of-8 tile (~256 KiB at D=128/f32) so the (8,128) constraint
    # holds and per-block VMEM stays small on every chip generation.
    tile_s = S if S <= seq_tile else seq_tile
    num_s = pl.cdiv(S, tile_s)

    # Grid ordering: batch innermost so the pe block index (s, 0) is constant
    # across the inner B steps -> the pipeliner skips re-fetching pe and its
    # HBM traffic stays S*D instead of B*S*D.
    grid = (num_s, B)

    return pl.pallas_call(
        _add_pe_kernel,
        out_shape=jax.ShapeDtypeStruct((B, S, D), x.dtype),
        grid=grid,
        in_specs=[
            # per-(batch, S-tile) activation block; batch dim squeezed
            pl.BlockSpec((None, tile_s, D), lambda s, b: (b, s, 0)),
            # positional table slice: independent of b (broadcast over batch)
            pl.BlockSpec((tile_s, D), lambda s, b: (s, 0)),
        ],
        out_specs=pl.BlockSpec((None, tile_s, D), lambda s, b: (b, s, 0)),
        compiler_params=pltpu.CompilerParams(
            # both axes independent -> megacore can shard over S tiles even
            # when B == 1 (keeps both v7x TensorCores streaming)
            dimension_semantics=("parallel", "parallel"),
        ),
    )(x, pe_s)


# ---------------------------------- main --------------------------------------
if __name__ == "__main__":
    key = jax.random.PRNGKey(0)

    B, S, D = 2, 16, 128          # small shapes; D=128 keeps the lane axis dense
    MAX_SEQ_LEN = 64

    x = jax.random.normal(key, (B, S, D), jnp.float32)
    pe = sinusoidal_table(MAX_SEQ_LEN, D)

    out = positional_encoding_forward(x, pe)
    jax.block_until_ready(out)

    # Reference check against plain XLA (same math as the PyTorch forward).
    ref = x + pe[None, :S, :]
    assert out.shape == (B, S, D), out.shape
    assert out.dtype == jnp.float32
    assert bool(jnp.all(jnp.isfinite(out)))
    assert bool(jnp.allclose(out, ref, atol=1e-6, rtol=1e-6))

    # Exercise the tiled path (S > seq_tile) to make sure multi-tile grids and
    # the constant-index pe reuse are correct too.
    S2 = 48
    x2 = jax.random.normal(jax.random.PRNGKey(1), (B, S2, D), jnp.float32)
    out2 = positional_encoding_forward(x2, pe, seq_tile=16)
    jax.block_until_ready(out2)
    ref2 = x2 + pe[None, :S2, :]
    assert bool(jnp.allclose(out2, ref2, atol=1e-6, rtol=1e-6))

    print("KERNEL_OK")
</pallas_src>

<mosaic_0001>
module attributes {stable_mosaic.version = 11 : i64} {
  func.func @_add_pe_kernel(%arg0: i32, %arg1: i32, %arg2: memref<1x16x128xf32, #tpu.memory_space<vmem>>, %arg3: memref<16x128xf32, #tpu.memory_space<vmem>>, %arg4: memref<1x16x128xf32, #tpu.memory_space<vmem>>) attributes {dimension_semantics = [#tpu.dimension_semantics<parallel>, #tpu.dimension_semantics<parallel>], iteration_bounds = array<i64: 1, 2>, scalar_prefetch = 0 : i64, scratch_operands = 0 : i64, tpu.core_type = #tpu.core_type<tc>, window_params = [{transform_indices = @transform_0, window_bounds = array<i64: 1, 16, 128>}, {transform_indices = @transform_1, window_bounds = array<i64: 16, 128>}, {transform_indices = @transform_2, window_bounds = array<i64: 1, 16, 128>}]} {
    %c0 = arith.constant 0 : index
    %c0_0 = arith.constant 0 : index
    %c0_1 = arith.constant 0 : index
    %0 = vector.load %arg2[%c0, %c0_0, %c0_1] : memref<1x16x128xf32, #tpu.memory_space<vmem>>, vector<1x16x128xf32>
    %1 = vector.shape_cast %0 : vector<1x16x128xf32> to vector<16x128xf32>
    %c0_2 = arith.constant 0 : index
    %c0_3 = arith.constant 0 : index
    %2 = vector.load %arg3[%c0_2, %c0_3] : memref<16x128xf32, #tpu.memory_space<vmem>>, vector<16x128xf32>
    %3 = arith.addf %1, %2 : vector<16x128xf32>
    %c0_4 = arith.constant 0 : index
    %c0_5 = arith.constant 0 : index
    %c0_6 = arith.constant 0 : index
    %4 = vector.load %arg4[%c0_4, %c0_5, %c0_6] : memref<1x16x128xf32, #tpu.memory_space<vmem>>, vector<1x16x128xf32>
    %5 = vector.shape_cast %4 : vector<1x16x128xf32> to vector<16x128xf32>
    %6 = vector.shape_cast %3 : vector<16x128xf32> to vector<1x16x128xf32>
    tpu.vector_store %arg4[%c0_4, %c0_5, %c0_6], %6 {strides = array<i32>} : memref<1x16x128xf32, #tpu.memory_space<vmem>>, vector<1x16x128xf32>,
    return
  }
  func.func @transform_0(%arg0: i32, %arg1: i32) -> (i32, i32, i32) {
    %c0_i32 = arith.constant 0 : i32
    %c0_i32_0 = arith.constant 0 : i32
    return %arg1, %arg0, %c0_i32 : i32, i32, i32
  }
  func.func @transform_1(%arg0: i32, %arg1: i32) -> (i32, i32) {
    %c0_i32 = arith.constant 0 : i32
    %c0_i32_0 = arith.constant 0 : i32
    return %arg0, %c0_i32 : i32, i32
  }
  func.func @transform_2(%arg0: i32, %arg1: i32) -> (i32, i32, i32) {
    %c0_i32 = arith.constant 0 : i32
    %c0_i32_0 = arith.constant 0 : i32
    return %arg1, %arg0, %c0_i32 : i32, i32, i32
  }
}

</mosaic_0001>

<llo_original>
// kernel: positional_encoding_forward.1
$region0: #{positional_encoding_forward.1}
  #allocation0 [shape = 'u32[]', space=smem, size = 0x4, offset = 0x4, fixed_abs, tag = 'smem constant byte address 0x4 - core index']
  #allocation1 [shape = 'u32[144,128]{1,0:T(1,128)}', space=vmem, size = 0x12000, scoped, tag = 'internal scratch']
  %s0 = inlined_call_operand.hbm [shape: f32[2,16,128], index: 0, kind: input, shape index: {}]
  %s1 = inlined_call_operand.vmem [shape: f32[16,128], index: 1, kind: input, shape index: {}]
  %s2 = inlined_call_operand.hbm [shape: f32[2,16,128], index: 2, kind: output, shape index: {}]
  %s3 = sld [smem:[#allocation0]]
  $region45: #{positional_encoding_forward.1} parent=0
    _
  %s5 = ssub.s32 1, %s3
  %s6 = scalar_select 0, %s5, %s3
  $region1: #{positional_encoding_forward.1} parent=0
    #allocation2 [shape = 'u8[16384]{0}', space=vmem, size = 0x4000, scoped, tag = 'input window, operand 0']
    #allocation3 [shape = 's32[2]{0}', space=sflag, size = 0x8, scoped, tag = 'scoped memory for positional_encoding_forward.1']
    #allocation4 [shape = 's32[2]{0}', space=sflag, size = 0x8, scoped, tag = 'scoped memory for positional_encoding_forward.1']
    #allocation5 [shape = 'u8[16384]{0}', space=vmem, size = 0x4000, scoped, tag = 'output window, operand 0']
    %7 = vsyncpa [#allocation3], 0
    %s8 = scalar_lea.sflag [#allocation3], 1
    %9 = vsyncpa %s8, 0
    %10 = vsyncpa [#allocation4], 0
    %s11 = scalar_lea.sflag [#allocation4], 1
    %12 = vsyncpa %s11, 0
    loop: start=0, step=1, limit=4
    $region2: #{positional_encoding_forward.1} parent=1 // loop_pre_header
      _
    $region3: #{positional_encoding_forward.1} parent=1 // loop_header
      %s14 = sphi 0, %s18
      %p15 = scmp.ge.s32.totalorder %s14, 4
      %s21 = sphi 0, %s33
      %s22 = sphi 0, %s29
      %s23 = sphi 0, %s21
      %s24 = sphi 0, %s22
      %s25 = sphi 0, %s23
      %s26 = sphi 0, %s24
      %s38 = sphi 0, %s40
      %s41 = sphi 0, %s38
      %s42 = sphi 0, %s41
      %s58 = sphi 0, %s42
      %s64 = sphi 0, %s66
      %s67 = sphi 0, %s64
      %s68 = sphi 0, %s67
      %s84 = sphi 0, %s68
      %s92 = sphi 0, %s94
      %s95 = sphi 0, %s92
      %s96 = sphi 0, %s95
      %s112 = sphi 0, %s96
    $region4: #{positional_encoding_forward.1} parent=1 // loop_header_branch
      %17 = sbr.rel (%p15) target = $region8
    $region5: #{positional_encoding_forward.1} parent=1 // loop_body
      %s19 = ssub.s32 %s14, 1
      %s20 = ssub.s32 %s14, 2
      %s27 = sadd.s32 1, %s22
      %p28 = scmp.ge.s32.totalorder %s27, 2
      %s29 = scalar_select %p28, 0, %s27
      %s30 = sadd.s32 1, %s21
      %s31 = scalar_select %p28, %s30, %s21
      %p32 = scmp.ge.s32.totalorder %s31, 1
      %s33 = scalar_select %p32, 0, %s31
      %s34 = ssub.s32 %s22, %s29
      %s35 = ssub.s32 %s21, %s33
      %s36 = sor.u32 %s34, %s35
      %p37 = scmp.eq.s32.totalorder %s36, 0
      %s39 = sadd.s32 %s38, 1
      %s40 = scalar_select %p37, %s38, %s39
      %p43 = pneg %p37
      %p44 = scmp.eq.s32.totalorder %s14, 1
      %p45 = por %p43, %p44
      %p46 = scmp.ne.s32.totalorder %s38, %s41
      %p47 = scmp.eq.s32.totalorder %s14, 0
      %p48 = por %p46, %p47
      %p49 = scmp.ne.s32.totalorder %s38, %s41
      %p50 = scmp.eq.s32.totalorder %s19, 1
      %p51 = por %p49, %p50
      %p52 = scmp.ne.s32.totalorder %s41, %s42
      %p53 = scmp.eq.s32.totalorder %s19, 0
      %p54 = por %p52, %p53
      %p55 = scmp.ne.s32.totalorder %s41, %s42
      %p56 = scmp.eq.s32.totalorder %s20, 1
      %p57 = por %p55, %p56
      %p59 = scmp.ne.s32.totalorder %s42, %s58
      %p60 = scmp.eq.s32.totalorder %s20, 0
      %p61 = por %p59, %p60
      %s62 = ssub.s32 %s21, %s33
      %p63 = scmp.eq.s32.totalorder %s62, 0
      %s65 = sadd.s32 %s64, 1
      %s66 = scalar_select %p63, %s64, %s65
      %p69 = pneg %p63
      %p70 = scmp.eq.s32.totalorder %s14, 1
      %p71 = por %p69, %p70
      %p72 = scmp.ne.s32.totalorder %s64, %s67
      %p73 = scmp.eq.s32.totalorder %s14, 0
      %p74 = por %p72, %p73
      %p75 = scmp.ne.s32.totalorder %s64, %s67
      %p76 = scmp.eq.s32.totalorder %s19, 1
      %p77 = por %p75, %p76
      %p78 = scmp.ne.s32.totalorder %s67, %s68
      %p79 = scmp.eq.s32.totalorder %s19, 0
      %p80 = por %p78, %p79
      %p81 = scmp.ne.s32.totalorder %s67, %s68
      %p82 = scmp.eq.s32.totalorder %s20, 1
      %p83 = por %p81, %p82
      %p85 = scmp.ne.s32.totalorder %s68, %s84
      %p86 = scmp.eq.s32.totalorder %s20, 0
      %p87 = por %p85, %p86
      %s88 = ssub.s32 %s22, %s29
      %s89 = ssub.s32 %s21, %s33
      %s90 = sor.u32 %s88, %s89
      %p91 = scmp.eq.s32.totalorder %s90, 0
      %s93 = sadd.s32 %s92, 1
      %s94 = scalar_select %p91, %s92, %s93
      %p97 = pneg %p91
      %p98 = scmp.eq.s32.totalorder %s14, 1
      %p99 = por %p97, %p98
      %p100 = scmp.ne.s32.totalorder %s92, %s95
      %p101 = scmp.eq.s32.totalorder %s14, 0
      %p102 = por %p100, %p101
      %p103 = scmp.ne.s32.totalorder %s92, %s95
      %p104 = scmp.eq.s32.totalorder %s19, 1
      %p105 = por %p103, %p104
      %p106 = scmp.ne.s32.totalorder %s95, %s96
      %p107 = scmp.eq.s32.totalorder %s19, 0
      %p108 = por %p106, %p107
      %p109 = scmp.ne.s32.totalorder %s95, %s96
      %p110 = scmp.eq.s32.totalorder %s20, 1
      %p111 = por %p109, %p110
      %p113 = scmp.ne.s32.totalorder %s96, %s112
      %p114 = scmp.eq.s32.totalorder %s20, 0
      %p115 = por %p113, %p114
      %p116 = scmp.le.s32.totalorder 1, %s14
      %p117 = scmp.lt.s32.totalorder %s14, 3
      %p118 = pnand %p116, %p117
      %p119 = pneg %p118
      // Predicated region
      $region9: #{positional_encoding_forward.1} parent=5 // pred_check
        _
      $region10: #{positional_encoding_forward.1} parent=5 // pred_check_branch
        %121 = sbr.rel (%p118) target = $region12
      $region11: #{positional_encoding_forward.1} parent=5 // pred_region
        %s122 = ssub.s32 %s14, 1
        // Predicated region
        $region13: #{positional_encoding_forward.1} parent=11 // pred_check
          %p123 = pneg %p80
        $region14: #{positional_encoding_forward.1} parent=11 // pred_check_branch
          %125 = sbr.rel (%p123) target = $region16
        $region15: #{positional_encoding_forward.1} parent=11 // pred_region
          %s126 = smul.u32 2, %s23
          %p127 = scmp.lt.s32.totalorder %s126, 1
          %s128 = scalar_select %p127, %s126, 1
          %s129 = smul.addr %s128, 8
          %s130 = scalar_lea.vmem %s1, %s129
          %s131 = smul.u32 2, %s23
        $region16: #{positional_encoding_forward.1} parent=11 // pred_fallthru
          _
      $region12: #{positional_encoding_forward.1} parent=5 // pred_fallthru
        _
      %p132 = scmp.lt.s32.totalorder %s14, 2
      // Predicated region
      $region17: #{positional_encoding_forward.1} parent=5 // pred_check
        %p133 = pneg %p132
      $region18: #{positional_encoding_forward.1} parent=5 // pred_check_branch
        %135 = sbr.rel (%p133) target = $region20
      $region19: #{positional_encoding_forward.1} parent=5 // pred_region
        // Predicated region
        $region21: #{positional_encoding_forward.1} parent=19 // pred_check
          %p136 = pneg %p48
        $region22: #{positional_encoding_forward.1} parent=19 // pred_check_branch
          %138 = sbr.rel (%p136) target = $region24
        $region23: #{positional_encoding_forward.1} parent=19 // pred_region
          %s139 = sand.u32 %s38, 1
          %s140 = scalar_lea.sflag [#allocation3], %s139
          %s141 = sand.u32 %s38, 1
          %s142 = smul.addr %s141, 16
          %s143 = scalar_lea.vmem [#allocation2], %s142
          %s144 = smul.u32 2, %s21
          %s146 = ssub.s32 256, 256
          %147 = vsyncadd %s140, %s146
          %s148 = smul.addr %s22, 2
          %s149 = sadd.s32 %s144, %s148
          %s150 = smul.addr %s149, 128
          %s151 = scalar_lea.hbm %s0, %s150
          %s152 = sshll.u32 %s143, 4
          %s153 = int_to_ptr.vmem [resolvable:$true] %s152
          %158 = dma.hbm_to_vmem [thread:$0]  %s151, 256, %s153, %s140, 128, 128, 8
        $region24: #{positional_encoding_forward.1} parent=19 // pred_fallthru
          _
      $region20: #{positional_encoding_forward.1} parent=5 // pred_fallthru
        _
      %p159 = scmp.le.s32.totalorder 1, %s14
      %p160 = scmp.lt.s32.totalorder %s14, 3
      %p161 = pnand %p159, %p160
      %p162 = pneg %p161
      // Predicated region
      $region25: #{positional_encoding_forward.1} parent=5 // pred_check
        _
      $region26: #{positional_encoding_forward.1} parent=5 // pred_check_branch
        %164 = sbr.rel (%p161) target = $region28
      $region27: #{positional_encoding_forward.1} parent=5 // pred_region
        %s165 = ssub.s32 %s14, 1
        %s166 = sand.u32 %s41, 1
        %s167 = scalar_lea.sflag [#allocation3], %s166
        %s168 = sand.u32 %s41, 1
        %s169 = smul.addr %s168, 16
        %s170 = scalar_lea.vmem [#allocation2], %s169
        // Predicated region
        $region29: #{positional_encoding_forward.1} parent=27 // pred_check
          %p171 = pneg %p54
        $region30: #{positional_encoding_forward.1} parent=27 // pred_check_branch
          %173 = sbr.rel (%p171) target = $region32
        $region31: #{positional_encoding_forward.1} parent=27 // pred_region
          %174 = dma.done %s167, 256
        $region32: #{positional_encoding_forward.1} parent=27 // pred_fallthru
          _
        %s175 = sand.u32 %s41, 1
        %s176 = scalar_lea.sflag [#allocation3], %s175
        %s177 = sand.u32 %s41, 1
        %s178 = smul.addr %s177, 16
        %s179 = scalar_lea.vmem [#allocation2], %s178
        %p180 = pneg %p54
        %p181 = pneg %p51
        %s182 = smul.u32 2, %s23
        %p183 = scmp.lt.s32.totalorder %s182, 1
        %s184 = scalar_select %p183, %s182, 1
        %s185 = smul.addr %s184, 8
        %s186 = scalar_lea.vmem %s1, %s185
        %p187 = pneg %p80
        %p188 = pneg %p77
        %p189 = pneg %p108
        %p190 = pneg %p105
        %s191 = sand.u32 %s95, 1
        %s192 = scalar_lea.sflag [#allocation4], %s191
        %s193 = sand.u32 %s95, 1
        %s194 = smul.addr %s193, 16
        %s195 = scalar_lea.vmem [#allocation5], %s194
        %s196 = smul.u32 2, %s23
        %s197 = smul.u32 2, %s23
        %p198 = scmp.lt.s32.totalorder %s197, 1
        %s199 = scalar_select %p198, %s197, 1
        %s200 = smul.addr %s199, 8
        %s201 = scalar_lea.vmem %s1, %s200
        %s202 = smul.u32 2, %s23
        %s203 = smul.u32 2, %s23
        %v204 = vld [vmem:[%s170] sm:$0xff]
        %v205 = vld [vmem:[%s170 + $0x8] sm:$0xff]
        %v206 = vld [vmem:[%s201] sm:$0xff]
        %v207 = vld [vmem:[%s201 + $0x8] sm:$0xff]
        %v208 = vadd.f32 %v204, %v206
        %v209 = vadd.f32 %v205, %v207
        %210 = vst [vmem:[%s195] sm:$0xff] %v208
        %211 = vst [vmem:[%s195 + $0x8] sm:$0xff] %v209
        %s212 = sand.u32 %s95, 1
        %s213 = scalar_lea.sflag [#allocation4], %s212
        %s214 = sand.u32 %s95, 1
        %s215 = smul.addr %s214, 16
        %s216 = scalar_lea.vmem [#allocation5], %s215
        // Predicated region
        $region33: #{positional_encoding_forward.1} parent=27 // pred_check
          %p217 = pneg %p105
        $region34: #{positional_encoding_forward.1} parent=27 // pred_check_branch
          %219 = sbr.rel (%p217) target = $region36
        $region35: #{positional_encoding_forward.1} parent=27 // pred_region
          %s220 = smul.u32 2, %s23
          %s222 = ssub.s32 256, 256
          %223 = vsyncadd %s213, %s222
          %s224 = smul.addr %s24, 2
          %s225 = sadd.s32 %s220, %s224
          %s226 = smul.addr %s225, 128
          %s227 = scalar_lea.hbm %s2, %s226
          %s228 = sshll.u32 %s216, 4
          %s229 = int_to_ptr.vmem [resolvable:$true] %s228
          %234 = dma.vmem_to_hbm [thread:$0]  %s229, 256, %s227, %s213, 128, 128, 8
        $region36: #{positional_encoding_forward.1} parent=27 // pred_fallthru
          _
      $region28: #{positional_encoding_forward.1} parent=5 // pred_fallthru
        _
      %p235 = scmp.le.s32.totalorder 2, %s14
      // Predicated region
      $region37: #{positional_encoding_forward.1} parent=5 // pred_check
        %p236 = pneg %p235
      $region38: #{positional_encoding_forward.1} parent=5 // pred_check_branch
        %238 = sbr.rel (%p236) target = $region40
      $region39: #{positional_encoding_forward.1} parent=5 // pred_region
        %s239 = ssub.s32 %s14, 2
        // Predicated region
        $region41: #{positional_encoding_forward.1} parent=39 // pred_check
          %p240 = pneg %p111
        $region42: #{positional_encoding_forward.1} parent=39 // pred_check_branch
          %242 = sbr.rel (%p240) target = $region44
        $region43: #{positional_encoding_forward.1} parent=39 // pred_region
          %s243 = sand.u32 %s96, 1
          %s244 = scalar_lea.sflag [#allocation4], %s243
          %s245 = sand.u32 %s96, 1
          %s246 = smul.addr %s245, 16
          %s247 = scalar_lea.vmem [#allocation5], %s246
          %248 = dma.done %s244, 256
        $region44: #{positional_encoding_forward.1} parent=39 // pred_fallthru
          _
      $region40: #{positional_encoding_forward.1} parent=5 // pred_fallthru
        _
    $region6: #{positional_encoding_forward.1} parent=1 // loop_footer
      %s18 = sadd.s32 1, %s14
    $region7: #{positional_encoding_forward.1} parent=1 // loop_footer_branch
      %13 = sbr.rel target = $region3
    $region8: #{positional_encoding_forward.1} parent=1 // loop_exit
      _
    %249 = vsyncpa [#allocation3], 1
    %s250 = scalar_lea.sflag [#allocation3], 1
    %251 = vsyncpa %s250, 1
    %252 = vsyncpa [#allocation4], 1
    %s253 = scalar_lea.sflag [#allocation4], 1
    %254 = vsyncpa %s253, 1

</llo_original>
